<compile_context>
chip_gen: v6e
topology: v6e:2x2x1
jax: 0.10.0
libtpu: 0.0.40
codegen_flags: <defaults>
</compile_context>

<pallas_src>
import math
import string
from functools import partial

import jax
import jax.numpy as jnp
from jax import lax
from jax.experimental import pallas as pl
from jax.experimental.pallas import tpu as pltpu

ALL_LETTERS = string.ascii_letters + " .,;'"
N_LETTERS = len(ALL_LETTERS)        # 57
N_HIDDEN = 128
N_CATEGORIES = 18                   # all_categories is empty in the snippet; use the
                                    # standard 18-language name-classification size.
WEIGHT_DTYPE = jnp.bfloat16         # weights feed the MXU in bf16; accumulation is f32.
MAX_CHUNK = 8                       # timesteps executed per grid step in the recurrence


def _round_up(n, m):
    return pl.cdiv(n, m) * m


# ---------- Phase 1: batched input projection (all timesteps, one MXU pass) ----------
def gx_kernel(x_ref, w_ref, b_ref, gx_ref):
    gx_ref[...] = (jnp.dot(x_ref[...].astype(w_ref.dtype), w_ref[...],
                           preferred_element_type=jnp.float32)
                   + b_ref[...])                       # bias (gate-scaled) folded here


# ---------- Phase 2: serial recurrence (only h @ W_hh^T per step) --------------------
def lstm_rec_kernel(gx_ref, h0_ref, c0_ref, whh_ref, aff_ref,
                    hseq_ref, hn_ref, cn_ref, *, seq_len, chunk_size, needs_mask):
    """One grid step == chunk_size LSTM timesteps.  W_hh and the h/c carries are
    VMEM-resident across the grid (constant index_maps)."""
    t_chunk = pl.program_id(0)
    H = h0_ref.shape[-1]

    @pl.when(t_chunk == 0)
    def _():                                           # load the initial state once
        hn_ref[...] = h0_ref[...]
        cn_ref[...] = c0_ref[...]

    w_hh = whh_ref[...]                                # (H, 4H) bf16, 0.5 scale pre-folded
    mul = aff_ref[0:1, :]                              # (1, 4H) per-gate multiplier
    add = aff_ref[1:2, :]                              # (1, 4H) per-gate offset

    def step(i, carry):
        h, c = carry                                   # (B, H) f32
        g = gx_ref[i] + jnp.dot(h.astype(w_hh.dtype), w_hh,
                                preferred_element_type=jnp.float32)   # (B, 4H)
        # One EUP tanh pass for all 4 gates: sigmoid(z) = 0.5*tanh(0.5z)+0.5, tanh for g.
        a = jnp.tanh(g) * mul + add
        i_g = a[:, 0 * H:1 * H]
        f_g = a[:, 1 * H:2 * H]
        g_g = a[:, 2 * H:3 * H]
        o_g = a[:, 3 * H:4 * H]
        c_new = f_g * c + i_g * g_g
        h_new = o_g * jnp.tanh(c_new)
        if needs_mask:                                 # static flag: tail-padded steps
            keep = ((t_chunk * chunk_size + i) < seq_len).astype(jnp.float32)
            drop = 1.0 - keep
            c_new = keep * c_new + drop * c
            h_new = keep * h_new + drop * h
        hseq_ref[i] = h_new
        return (h_new, c_new)

    h_fin, c_fin = lax.fori_loop(0, chunk_size, step,
                                 (hn_ref[...], cn_ref[...]), unroll=True)
    hn_ref[...] = h_fin                                # carries stored once per chunk
    cn_ref[...] = c_fin


# ---------- Phase 3: batched Linear + LogSoftmax over all timesteps ------------------
def linear_logsoftmax_kernel(h_ref, w_ref, b_ref, out_ref):
    # Padded logit lanes carry bias -1e30 (f32), so they vanish from max/logsumexp.
    logits = (jnp.dot(h_ref[...].astype(w_ref.dtype), w_ref[...],
                      preferred_element_type=jnp.float32)
              + b_ref[...])                            # (M, OP) f32, lane-dense
    m = jnp.max(logits, axis=-1, keepdims=True)
    lse = jnp.log(jnp.sum(jnp.exp(logits - m), axis=-1, keepdims=True)) + m
    out_ref[...] = logits - lse


def prepare_params(params, input_size):
    """One-time weight prep: transpose, pad, gate-scale fold, bias fold, bf16 cast."""
    w_ih, w_hh, b_ih, b_hh, w_lin, b_lin = params
    H = w_hh.shape[1]
    O = w_lin.shape[0]
    IP = _round_up(input_size, 128)                    # 57  -> 128
    OP = _round_up(O, 128)                             # 18  -> 128

    ones = jnp.ones((H,), jnp.float32)
    # PyTorch gate order i, f, g, o. Fold the 0.5 pre-scale of sigmoid into the weights
    # (exact in bf16: multiply by 0.5 only shifts the exponent).
    scale = jnp.concatenate([0.5 * ones, 0.5 * ones, ones, 0.5 * ones])        # (4H,)
    gate_mul = jnp.concatenate([0.5 * ones, 0.5 * ones, ones, 0.5 * ones])[None]
    gate_add = jnp.concatenate([0.5 * ones, 0.5 * ones, 0.0 * ones, 0.5 * ones])[None]
    gate_aff = jnp.concatenate([gate_mul, gate_add], axis=0)                   # (2, 4H)

    w_ih_t = jnp.zeros((IP, 4 * H), jnp.float32).at[:input_size, :].set(
        w_ih.T.astype(jnp.float32))
    w_ih_p = (w_ih_t * scale[None, :]).astype(WEIGHT_DTYPE)                    # (IP, 4H)
    b_fold = ((b_ih + b_hh).astype(jnp.float32) * scale).reshape(1, 4 * H)     # (1, 4H)
    w_hh_p = (w_hh.T.astype(jnp.float32) * scale[None, :]).astype(WEIGHT_DTYPE)  # (H,4H)

    w_lin_p = (jnp.zeros((H, OP), jnp.float32)
               .at[:, :O].set(w_lin.T.astype(jnp.float32))).astype(WEIGHT_DTYPE)
    b_lin_p = jnp.full((1, OP), -1e30, jnp.float32).at[0, :O].set(
        b_lin.astype(jnp.float32))
    return (w_ih_p, b_fold, w_hh_p, gate_aff, w_lin_p, b_lin_p)


@partial(jax.jit, static_argnames=("n_out",))
def lstm_run_sequence(x_seq, hidden, c, prepped, *, n_out):
    """Run a whole sequence: batched input projection -> chunked recurrence -> batched
    Linear+LogSoftmax.

    x_seq: (T, 1, input_size)   hidden/c: (1, 1, H)
    returns (log_probs (T,1,n_out), hn (1,1,H), cn (1,1,H))
    """
    w_ih_p, b_fold, w_hh_p, gate_aff, w_lin_p, b_lin_p = prepped
    T, B, I = x_seq.shape
    IP, G4 = w_ih_p.shape
    H = G4 // 4
    OP = w_lin_p.shape[1]

    TS = T if T <= MAX_CHUNK else MAX_CHUNK            # timesteps per grid step
    TP = _round_up(T, TS)                              # padded sequence length

    # Zero-pad features to lane-dense IP and the time axis to a multiple of TS.
    x_flat = jnp.zeros((TP * B, IP), jnp.float32).at[:T * B, :I].set(
        x_seq.reshape(T * B, I).astype(jnp.float32))

    # ---- Phase 1: G_x = x @ W_ih^T + b for all timesteps (single MXU pass, M = TP*B).
    gx_flat = pl.pallas_call(
        gx_kernel,
        out_shape=jax.ShapeDtypeStruct((TP * B, G4), jnp.float32),
        grid=(1,),
        in_specs=[pl.BlockSpec((TP * B, IP), lambda i: (0, 0)),
                  pl.BlockSpec((IP, G4), lambda i: (0, 0)),
                  pl.BlockSpec((1, G4), lambda i: (0, 0))],
        out_specs=pl.BlockSpec((TP * B, G4), lambda i: (0, 0)),
    )(x_flat, w_ih_p, b_fold)
    gx = gx_flat.reshape(TP, B, G4)

    h0 = hidden.reshape(B, H).astype(jnp.float32)
    c0 = c.reshape(B, H).astype(jnp.float32)

    # ---- Phase 2: serial recurrence over time chunks; weights/carries VMEM-resident.
    rec_kernel = partial(lstm_rec_kernel, seq_len=T, chunk_size=TS,
                         needs_mask=(TP != T))
    hseq, hn, cn = pl.pallas_call(
        rec_kernel,
        out_shape=(
            jax.ShapeDtypeStruct((TP, B, H), jnp.float32),   # h_t for every step
            jax.ShapeDtypeStruct((B, H), jnp.float32),       # hn (recurrent carry)
            jax.ShapeDtypeStruct((B, H), jnp.float32),       # cn (recurrent carry)
        ),
        grid=(TP // TS,),
        in_specs=[
            pl.BlockSpec((TS, B, G4), lambda t: (t, 0, 0)),  # precomputed x-gates chunk
            pl.BlockSpec((B, H), lambda t: (0, 0)),          # h0       (resident)
            pl.BlockSpec((B, H), lambda t: (0, 0)),          # c0       (resident)
            pl.BlockSpec((H, G4), lambda t: (0, 0)),         # W_hh^T   (resident)
            pl.BlockSpec((2, G4), lambda t: (0, 0)),         # gate mul/add (resident)
        ],
        out_specs=(
            pl.BlockSpec((TS, B, H), lambda t: (t, 0, 0)),   # per-chunk h_t block
            pl.BlockSpec((B, H), lambda t: (0, 0)),          # hn carry  (resident)
            pl.BlockSpec((B, H), lambda t: (0, 0)),          # cn carry  (resident)
        ),
        compiler_params=pltpu.CompilerParams(
            dimension_semantics=("arbitrary",)),             # recurrence -> sequential
    )(gx, h0, c0, w_hh_p, gate_aff)

    # ---- Phase 3: Linear + LogSoftmax over all timesteps at once (lane-dense OP).
    out_flat = pl.pallas_call(
        linear_logsoftmax_kernel,
        out_shape=jax.ShapeDtypeStruct((TP * B, OP), jnp.float32),
        grid=(1,),
        in_specs=[pl.BlockSpec((TP * B, H), lambda i: (0, 0)),
                  pl.BlockSpec((H, OP), lambda i: (0, 0)),
                  pl.BlockSpec((1, OP), lambda i: (0, 0))],
        out_specs=pl.BlockSpec((TP * B, OP), lambda i: (0, 0)),
    )(hseq.reshape(TP * B, H), w_lin_p, b_lin_p)

    out = out_flat.reshape(TP, B, OP)[:T, :, :n_out]
    return out, hn.reshape(1, B, H), cn.reshape(1, B, H)


def lstm_forward(x, hidden, c, prepped, *, n_out=N_CATEGORIES):
    """Mirror of LSTM.forward(input, hidden, c): x is (1, input_size)."""
    return lstm_run_sequence(x[None, ...], hidden, c, prepped, n_out=n_out)


def init_params(key, input_size, hidden_size, output_size):
    """Deterministic init matching PyTorch's default shapes (U(-k, k))."""
    k_lstm = 1.0 / math.sqrt(hidden_size)
    k_lin = 1.0 / math.sqrt(hidden_size)
    keys = jax.random.split(key, 6)
    w_ih = jax.random.uniform(keys[0], (4 * hidden_size, input_size),
                              jnp.float32, -k_lstm, k_lstm)
    w_hh = jax.random.uniform(keys[1], (4 * hidden_size, hidden_size),
                              jnp.float32, -k_lstm, k_lstm)
    b_ih = jax.random.uniform(keys[2], (4 * hidden_size,), jnp.float32, -k_lstm, k_lstm)
    b_hh = jax.random.uniform(keys[3], (4 * hidden_size,), jnp.float32, -k_lstm, k_lstm)
    w_lin = jax.random.uniform(keys[4], (output_size, hidden_size),
                               jnp.float32, -k_lin, k_lin)
    b_lin = jax.random.uniform(keys[5], (output_size,), jnp.float32, -k_lin, k_lin)
    return (w_ih, w_hh, b_ih, b_hh, w_lin, b_lin)


def line_to_tensor(line):
    """lineToTensor: (len(line), 1, n_letters) one-hot."""
    idx = jnp.array([ALL_LETTERS.find(ch) for ch in line], jnp.int32)
    return jax.nn.one_hot(idx, N_LETTERS, dtype=jnp.float32)[:, None, :]


if __name__ == "__main__":
    key = jax.random.PRNGKey(0)
    params = init_params(key, N_LETTERS, N_HIDDEN, N_CATEGORIES)
    prepped = prepare_params(params, N_LETTERS)      # one-time weight prep

    # forward(lineToTensor('B').squeeze(0), hidden, c) with hidden = c = zeros(1,1,128)
    x_b = line_to_tensor("B")[0]                     # (1, 57)
    hidden = jnp.zeros((1, 1, N_HIDDEN), jnp.float32)
    c0 = jnp.zeros((1, 1, N_HIDDEN), jnp.float32)

    log_probs, hn, cn = lstm_forward(x_b, hidden, c0, prepped)
    jax.block_until_ready((log_probs, hn, cn))

    assert log_probs.shape == (1, 1, N_CATEGORIES)
    assert hn.shape == (1, 1, N_HIDDEN) and cn.shape == (1, 1, N_HIDDEN)
    assert abs(float(jnp.sum(jnp.exp(log_probs))) - 1.0) < 1e-4   # log-softmax normalizes

    # Whole name 'Bai' (recurrence in one grid step, batched pre/post passes) must match
    # chaining the single-step forward 3 times.
    line = "Bai"
    x_seq = line_to_tensor(line)                     # (3, 1, 57)
    seq_out, seq_hn, seq_cn = lstm_run_sequence(x_seq, hidden, c0, prepped,
                                                n_out=N_CATEGORIES)

    h_i, c_i = hidden, c0
    step_outs = []
    for t in range(len(line)):
        o_t, h_i, c_i = lstm_forward(x_seq[t], h_i, c_i, prepped)
        step_outs.append(o_t)
    chained = jnp.concatenate(step_outs, axis=0)
    jax.block_until_ready((seq_out, chained))

    assert seq_out.shape == (len(line), 1, N_CATEGORIES)
    assert jnp.allclose(seq_out, chained, atol=1e-5)
    assert jnp.allclose(seq_hn, h_i, atol=1e-6) and jnp.allclose(seq_cn, c_i, atol=1e-6)

    print("KERNEL_OK")
</pallas_src>

<mosaic_0001>
module attributes {stable_mosaic.version = 11 : i64} {
  func.func @gx_kernel(%arg0: i32, %arg1: memref<1x128xf32, #tpu.memory_space<vmem>>, %arg2: memref<128x512xbf16, #tpu.memory_space<vmem>>, %arg3: memref<1x512xf32, #tpu.memory_space<vmem>>, %arg4: memref<1x512xf32, #tpu.memory_space<vmem>>) attributes {dimension_semantics = [#tpu.dimension_semantics<arbitrary>], iteration_bounds = array<i64: 1>, scalar_prefetch = 0 : i64, scratch_operands = 0 : i64, tpu.core_type = #tpu.core_type<tc>, window_params = [{pipeline_mode = #tpu.pipeline_mode<synchronous>, transform_indices = @transform_0, window_bounds = array<i64: 1, 128>}, {pipeline_mode = #tpu.pipeline_mode<synchronous>, transform_indices = @transform_1, window_bounds = array<i64: 128, 512>}, {pipeline_mode = #tpu.pipeline_mode<synchronous>, transform_indices = @transform_2, window_bounds = array<i64: 1, 512>}, {pipeline_mode = #tpu.pipeline_mode<synchronous>, transform_indices = @transform_3, window_bounds = array<i64: 1, 512>}]} {
    %c0 = arith.constant 0 : index
    %c0_0 = arith.constant 0 : index
    %0 = vector.load %arg1[%c0, %c0_0] : memref<1x128xf32, #tpu.memory_space<vmem>>, vector<1x128xf32>
    %1 = arith.truncf %0 : vector<1x128xf32> to vector<1x128xbf16>
    %c0_1 = arith.constant 0 : index
    %c0_2 = arith.constant 0 : index
    %2 = vector.load %arg2[%c0_1, %c0_2] : memref<128x512xbf16, #tpu.memory_space<vmem>>, vector<128x512xbf16>
    %cst = arith.constant dense<0.000000e+00> : vector<1x512xf32>
    %3 = tpu.matmul %1, %2, %cst {dimension_numbers = #tpu.dot_dimension_numbers<[1], [0], [0], [1], [0, 0, 1, 1], [], []>} : vector<1x128xbf16>, vector<128x512xbf16>, vector<1x512xf32> -> vector<1x512xf32>
    %c0_3 = arith.constant 0 : index
    %c0_4 = arith.constant 0 : index
    %4 = vector.load %arg3[%c0_3, %c0_4] : memref<1x512xf32, #tpu.memory_space<vmem>>, vector<1x512xf32>
    %5 = arith.addf %3, %4 : vector<1x512xf32>
    %c0_5 = arith.constant 0 : index
    %c0_6 = arith.constant 0 : index
    %6 = vector.load %arg4[%c0_5, %c0_6] : memref<1x512xf32, #tpu.memory_space<vmem>>, vector<1x512xf32>
    tpu.vector_store %arg4[%c0_5, %c0_6], %5 {strides = array<i32>} : memref<1x512xf32, #tpu.memory_space<vmem>>, vector<1x512xf32>,
    return
  }
  func.func @transform_0(%arg0: i32) -> (i32, i32) {
    %c0_i32 = arith.constant 0 : i32
    %c0_i32_0 = arith.constant 0 : i32
    %c0_i32_1 = arith.constant 0 : i32
    return %c0_i32, %c0_i32_0 : i32, i32
  }
  func.func @transform_1(%arg0: i32) -> (i32, i32) {
    %c0_i32 = arith.constant 0 : i32
    %c0_i32_0 = arith.constant 0 : i32
    %c0_i32_1 = arith.constant 0 : i32
    return %c0_i32, %c0_i32_0 : i32, i32
  }
  func.func @transform_2(%arg0: i32) -> (i32, i32) {
    %c0_i32 = arith.constant 0 : i32
    %c0_i32_0 = arith.constant 0 : i32
    %c0_i32_1 = arith.constant 0 : i32
    return %c0_i32, %c0_i32_0 : i32, i32
  }
  func.func @transform_3(%arg0: i32) -> (i32, i32) {
    %c0_i32 = arith.constant 0 : i32
    %c0_i32_0 = arith.constant 0 : i32
    %c0_i32_1 = arith.constant 0 : i32
    return %c0_i32, %c0_i32_0 : i32, i32
  }
}

module attributes {stable_mosaic.version = 11 : i64} {
  func.func @linear_logsoftmax_kernel(%arg0: i32, %arg1: memref<1x128xf32, #tpu.memory_space<vmem>>, %arg2: memref<128x128xbf16, #tpu.memory_space<vmem>>, %arg3: memref<1x128xf32, #tpu.memory_space<vmem>>, %arg4: memref<1x128xf32, #tpu.memory_space<vmem>>) attributes {dimension_semantics = [#tpu.dimension_semantics<arbitrary>], iteration_bounds = array<i64: 1>, scalar_prefetch = 0 : i64, scratch_operands = 0 : i64, tpu.core_type = #tpu.core_type<tc>, window_params = [{pipeline_mode = #tpu.pipeline_mode<synchronous>, transform_indices = @transform_0, window_bounds = array<i64: 1, 128>}, {pipeline_mode = #tpu.pipeline_mode<synchronous>, transform_indices = @transform_1, window_bounds = array<i64: 128, 128>}, {pipeline_mode = #tpu.pipeline_mode<synchronous>, transform_indices = @transform_2, window_bounds = array<i64: 1, 128>}, {pipeline_mode = #tpu.pipeline_mode<synchronous>, transform_indices = @transform_3, window_bounds = array<i64: 1, 128>}]} {
    %c0 = arith.constant 0 : index
    %c0_0 = arith.constant 0 : index
    %0 = vector.load %arg1[%c0, %c0_0] : memref<1x128xf32, #tpu.memory_space<vmem>>, vector<1x128xf32>
    %1 = arith.truncf %0 : vector<1x128xf32> to vector<1x128xbf16>
    %c0_1 = arith.constant 0 : index
    %c0_2 = arith.constant 0 : index
    %2 = vector.load %arg2[%c0_1, %c0_2] : memref<128x128xbf16, #tpu.memory_space<vmem>>, vector<128x128xbf16>
    %cst = arith.constant dense<0.000000e+00> : vector<1x128xf32>
    %3 = tpu.matmul %1, %2, %cst {dimension_numbers = #tpu.dot_dimension_numbers<[1], [0], [0], [1], [0, 0, 1, 1], [], []>} : vector<1x128xbf16>, vector<128x128xbf16>, vector<1x128xf32> -> vector<1x128xf32>
    %c0_3 = arith.constant 0 : index
    %c0_4 = arith.constant 0 : index
    %4 = vector.load %arg3[%c0_3, %c0_4] : memref<1x128xf32, #tpu.memory_space<vmem>>, vector<1x128xf32>
    %5 = arith.addf %3, %4 : vector<1x128xf32>
    %cst_5 = arith.constant dense<0xFF800000> : vector<1xf32>
    %6 = vector.multi_reduction <maximumf>, %5, %cst_5 [1] : vector<1x128xf32> to vector<1xf32>
    %7 = vector.shape_cast %6 : vector<1xf32> to vector<1x1xf32>
    %8 = vector.broadcast %7 : vector<1x1xf32> to vector<1x128xf32>
    %9 = arith.subf %5, %8 : vector<1x128xf32>
    %10 = math.exp %9 : vector<1x128xf32>
    %cst_6 = arith.constant dense<0.000000e+00> : vector<1xf32>
    %11 = vector.multi_reduction <add>, %10, %cst_6 [1] : vector<1x128xf32> to vector<1xf32>
    %12 = vector.shape_cast %11 : vector<1xf32> to vector<1x1xf32>
    %13 = math.log %12 : vector<1x1xf32>
    %14 = arith.addf %13, %7 : vector<1x1xf32>
    %15 = vector.broadcast %14 : vector<1x1xf32> to vector<1x128xf32>
    %16 = arith.subf %5, %15 : vector<1x128xf32>
    %c0_7 = arith.constant 0 : index
    %c0_8 = arith.constant 0 : index
    %17 = vector.load %arg4[%c0_7, %c0_8] : memref<1x128xf32, #tpu.memory_space<vmem>>, vector<1x128xf32>
    tpu.vector_store %arg4[%c0_7, %c0_8], %16 {strides = array<i32>} : memref<1x128xf32, #tpu.memory_space<vmem>>, vector<1x128xf32>,
    return
  }
  func.func @transform_0(%arg0: i32) -> (i32, i32) {
    %c0_i32 = arith.constant 0 : i32
    %c0_i32_0 = arith.constant 0 : i32
    %c0_i32_1 = arith.constant 0 : i32
    return %c0_i32, %c0_i32_0 : i32, i32
  }
  func.func @transform_1(%arg0: i32) -> (i32, i32) {
    %c0_i32 = arith.constant 0 : i32
    %c0_i32_0 = arith.constant 0 : i32
    %c0_i32_1 = arith.constant 0 : i32
    return %c0_i32, %c0_i32_0 : i32, i32
  }
  func.func @transform_2(%arg0: i32) -> (i32, i32) {
    %c0_i32 = arith.constant 0 : i32
    %c0_i32_0 = arith.constant 0 : i32
    %c0_i32_1 = arith.constant 0 : i32
    return %c0_i32, %c0_i32_0 : i32, i32
  }
  func.func @transform_3(%arg0: i32) -> (i32, i32) {
    %c0_i32 = arith.constant 0 : i32
    %c0_i32_0 = arith.constant 0 : i32
    %c0_i32_1 = arith.constant 0 : i32
    return %c0_i32, %c0_i32_0 : i32, i32
  }
}

module attributes {stable_mosaic.version = 11 : i64} {
  func.func @lstm_rec_kernel(%arg0: i32, %arg1: memref<1x1x512xf32, #tpu.memory_space<vmem>>, %arg2: memref<1x128xf32, #tpu.memory_space<vmem>>, %arg3: memref<1x128xf32, #tpu.memory_space<vmem>>, %arg4: memref<128x512xbf16, #tpu.memory_space<vmem>>, %arg5: memref<2x512xf32, #tpu.memory_space<vmem>>, %arg6: memref<1x1x128xf32, #tpu.memory_space<vmem>>, %arg7: memref<1x128xf32, #tpu.memory_space<vmem>>, %arg8: memref<1x128xf32, #tpu.memory_space<vmem>>) attributes {dimension_semantics = [#tpu.dimension_semantics<arbitrary>], iteration_bounds = array<i64: 1>, scalar_prefetch = 0 : i64, scratch_operands = 0 : i64, tpu.core_type = #tpu.core_type<tc>, window_params = [{transform_indices = @transform_0, window_bounds = array<i64: 1, 1, 512>}, {pipeline_mode = #tpu.pipeline_mode<synchronous>, transform_indices = @transform_1, window_bounds = array<i64: 1, 128>}, {pipeline_mode = #tpu.pipeline_mode<synchronous>, transform_indices = @transform_2, window_bounds = array<i64: 1, 128>}, {pipeline_mode = #tpu.pipeline_mode<synchronous>, transform_indices = @transform_3, window_bounds = array<i64: 128, 512>}, {pipeline_mode = #tpu.pipeline_mode<synchronous>, transform_indices = @transform_4, window_bounds = array<i64: 2, 512>}, {transform_indices = @transform_5, window_bounds = array<i64: 1, 1, 128>}, {pipeline_mode = #tpu.pipeline_mode<synchronous>, transform_indices = @transform_6, window_bounds = array<i64: 1, 128>}, {pipeline_mode = #tpu.pipeline_mode<synchronous>, transform_indices = @transform_7, window_bounds = array<i64: 1, 128>}]} {
    %c0_i32 = arith.constant 0 : i32
    %0 = arith.cmpi eq, %arg0, %c0_i32 : i32
    %1 = arith.extui %0 : i1 to i32
    %c0_i32_0 = arith.constant 0 : i32
    %2 = arith.cmpi ne, %1, %c0_i32_0 : i32
    scf.if %2 {
      %c0_18 = arith.constant 0 : index
      %c0_19 = arith.constant 0 : index
      %32 = vector.load %arg2[%c0_18, %c0_19] : memref<1x128xf32, #tpu.memory_space<vmem>>, vector<1x128xf32>
      %c0_20 = arith.constant 0 : index
      %c0_21 = arith.constant 0 : index
      %33 = vector.load %arg7[%c0_20, %c0_21] : memref<1x128xf32, #tpu.memory_space<vmem>>, vector<1x128xf32>
      tpu.vector_store %arg7[%c0_20, %c0_21], %32 {strides = array<i32>} : memref<1x128xf32, #tpu.memory_space<vmem>>, vector<1x128xf32>,
      %c0_22 = arith.constant 0 : index
      %c0_23 = arith.constant 0 : index
      %34 = vector.load %arg3[%c0_22, %c0_23] : memref<1x128xf32, #tpu.memory_space<vmem>>, vector<1x128xf32>
      %c0_24 = arith.constant 0 : index
      %c0_25 = arith.constant 0 : index
      %35 = vector.load %arg8[%c0_24, %c0_25] : memref<1x128xf32, #tpu.memory_space<vmem>>, vector<1x128xf32>
      tpu.vector_store %arg8[%c0_24, %c0_25], %34 {strides = array<i32>} : memref<1x128xf32, #tpu.memory_space<vmem>>, vector<1x128xf32>,
    } else {
    }
    %c0 = arith.constant 0 : index
    %c0_1 = arith.constant 0 : index
    %3 = vector.load %arg4[%c0, %c0_1] : memref<128x512xbf16, #tpu.memory_space<vmem>>, vector<128x512xbf16>
    %c0_2 = arith.constant 0 : index
    %c0_3 = arith.constant 0 : index
    %4 = vector.load %arg5[%c0_2, %c0_3] : memref<2x512xf32, #tpu.memory_space<vmem>>, vector<1x512xf32>
    %c1 = arith.constant 1 : index
    %c0_4 = arith.constant 0 : index
    %5 = vector.load %arg5[%c1, %c0_4] : memref<2x512xf32, #tpu.memory_space<vmem>>, vector<1x512xf32>
    %c0_5 = arith.constant 0 : index
    %c0_6 = arith.constant 0 : index
    %6 = vector.load %arg7[%c0_5, %c0_6] : memref<1x128xf32, #tpu.memory_space<vmem>>, vector<1x128xf32>
    %c0_7 = arith.constant 0 : index
    %c0_8 = arith.constant 0 : index
    %7 = vector.load %arg8[%c0_7, %c0_8] : memref<1x128xf32, #tpu.memory_space<vmem>>, vector<1x128xf32>
    %c0_i32_9 = arith.constant 0 : i32
    %8 = arith.index_cast %c0_i32_9 : i32 to index
    %c0_10 = arith.constant 0 : index
    %c0_11 = arith.constant 0 : index
    %9 = vector.load %arg1[%8, %c0_10, %c0_11] : memref<1x1x512xf32, #tpu.memory_space<vmem>>, vector<1x1x512xf32>
    %10 = vector.shape_cast %9 : vector<1x1x512xf32> to vector<1x512xf32>
    %11 = arith.truncf %6 : vector<1x128xf32> to vector<1x128xbf16>
    %cst = arith.constant dense<0.000000e+00> : vector<1x512xf32>
    %12 = tpu.matmul %11, %3, %cst {dimension_numbers = #tpu.dot_dimension_numbers<[1], [0], [0], [1], [0, 0, 1, 1], [], []>} : vector<1x128xbf16>, vector<128x512xbf16>, vector<1x512xf32> -> vector<1x512xf32>
    %13 = arith.addf %10, %12 : vector<1x512xf32>
    %14 = math.tanh %13 : vector<1x512xf32>
    %15 = arith.mulf %14, %4 : vector<1x512xf32>
    %16 = arith.addf %15, %5 : vector<1x512xf32>
    %17 = vector.extract_strided_slice %16 {offsets = [0, 0], sizes = [1, 128], strides = [1, 1]} : vector<1x512xf32> to vector<1x128xf32>
    %18 = vector.extract_strided_slice %16 {offsets = [0, 128], sizes = [1, 128], strides = [1, 1]} : vector<1x512xf32> to vector<1x128xf32>
    %19 = vector.extract_strided_slice %16 {offsets = [0, 256], sizes = [1, 128], strides = [1, 1]} : vector<1x512xf32> to vector<1x128xf32>
    %20 = vector.extract_strided_slice %16 {offsets = [0, 384], sizes = [1, 128], strides = [1, 1]} : vector<1x512xf32> to vector<1x128xf32>
    %21 = arith.mulf %18, %7 : vector<1x128xf32>
    %22 = arith.mulf %17, %19 : vector<1x128xf32>
    %23 = arith.addf %21, %22 : vector<1x128xf32>
    %24 = math.tanh %23 : vector<1x128xf32>
    %25 = arith.mulf %20, %24 : vector<1x128xf32>
    %26 = arith.index_cast %c0_i32_9 : i32 to index
    %c0_12 = arith.constant 0 : index
    %c0_13 = arith.constant 0 : index
    %27 = vector.load %arg6[%26, %c0_12, %c0_13] : memref<1x1x128xf32, #tpu.memory_space<vmem>>, vector<1x1x128xf32>
    %28 = vector.shape_cast %27 : vector<1x1x128xf32> to vector<1x128xf32>
    %29 = vector.shape_cast %25 : vector<1x128xf32> to vector<1x1x128xf32>
    tpu.vector_store %arg6[%26, %c0_12, %c0_13], %29 {strides = array<i32>} : memref<1x1x128xf32, #tpu.memory_space<vmem>>, vector<1x1x128xf32>,
    %c1_i32 = arith.constant 1 : i32
    %c0_14 = arith.constant 0 : index
    %c0_15 = arith.constant 0 : index
    %30 = vector.load %arg7[%c0_14, %c0_15] : memref<1x128xf32, #tpu.memory_space<vmem>>, vector<1x128xf32>
    tpu.vector_store %arg7[%c0_14, %c0_15], %25 {strides = array<i32>} : memref<1x128xf32, #tpu.memory_space<vmem>>, vector<1x128xf32>,
    %c0_16 = arith.constant 0 : index
    %c0_17 = arith.constant 0 : index
    %31 = vector.load %arg8[%c0_16, %c0_17] : memref<1x128xf32, #tpu.memory_space<vmem>>, vector<1x128xf32>
    tpu.vector_store %arg8[%c0_16, %c0_17], %23 {strides = array<i32>} : memref<1x128xf32, #tpu.memory_space<vmem>>, vector<1x128xf32>,
    return
  }
  func.func @transform_0(%arg0: i32) -> (i32, i32, i32) {
    %c0_i32 = arith.constant 0 : i32
    %c0_i32_0 = arith.constant 0 : i32
    %c0_i32_1 = arith.constant 0 : i32
    return %arg0, %c0_i32, %c0_i32_0 : i32, i32, i32
  }
  func.func @transform_1(%arg0: i32) -> (i32, i32) {
    %c0_i32 = arith.constant 0 : i32
    %c0_i32_0 = arith.constant 0 : i32
    %c0_i32_1 = arith.constant 0 : i32
    return %c0_i32, %c0_i32_0 : i32, i32
  }
  func.func @transform_2(%arg0: i32) -> (i32, i32) {
    %c0_i32 = arith.constant 0 : i32
    %c0_i32_0 = arith.constant 0 : i32
    %c0_i32_1 = arith.constant 0 : i32
    return %c0_i32, %c0_i32_0 : i32, i32
  }
  func.func @transform_3(%arg0: i32) -> (i32, i32) {
    %c0_i32 = arith.constant 0 : i32
    %c0_i32_0 = arith.constant 0 : i32
    %c0_i32_1 = arith.constant 0 : i32
    return %c0_i32, %c0_i32_0 : i32, i32
  }
  func.func @transform_4(%arg0: i32) -> (i32, i32) {
    %c0_i32 = arith.constant 0 : i32
    %c0_i32_0 = arith.constant 0 : i32
    %c0_i32_1 = arith.constant 0 : i32
    return %c0_i32, %c0_i32_0 : i32, i32
  }
  func.func @transform_5(%arg0: i32) -> (i32, i32, i32) {
    %c0_i32 = arith.constant 0 : i32
    %c0_i32_0 = arith.constant 0 : i32
    %c0_i32_1 = arith.constant 0 : i32
    return %arg0, %c0_i32, %c0_i32_0 : i32, i32, i32
  }
  func.func @transform_6(%arg0: i32) -> (i32, i32) {
    %c0_i32 = arith.constant 0 : i32
    %c0_i32_0 = arith.constant 0 : i32
    %c0_i32_1 = arith.constant 0 : i32
    return %c0_i32, %c0_i32_0 : i32, i32
  }
  func.func @transform_7(%arg0: i32) -> (i32, i32) {
    %c0_i32 = arith.constant 0 : i32
    %c0_i32_0 = arith.constant 0 : i32
    %c0_i32_1 = arith.constant 0 : i32
    return %c0_i32, %c0_i32_0 : i32, i32
  }
}

</mosaic_0001>

<llo_original>
// kernel: lstm_run_sequence.3
$region0: #{lstm_run_sequence.3}
  #allocation0 [shape = 'u32[]', space=smem, size = 0x4, offset = 0x4, fixed_abs, tag = 'smem constant byte address 0x4 - core index']
  #allocation1 [shape = 'u32[144,128]{1,0:T(1,128)}', space=vmem, size = 0x12000, scoped, tag = 'internal scratch']
  %s0 = inlined_call_operand.vmem [shape: f32[1,128], index: 0, kind: input, shape index: {}]
  %s1 = inlined_call_operand.hbm [shape: bf16[128,512], index: 1, kind: input, shape index: {}]
  %s2 = inlined_call_operand.hbm [shape: f32[1,512], index: 2, kind: input, shape index: {}]
  %s3 = inlined_call_operand.vmem [shape: f32[1,512], index: 3, kind: output, shape index: {}]
  %s4 = sld [smem:[#allocation0]]
  $region30: #{lstm_run_sequence.3} parent=0
    _
  %s6 = ssub.s32 1, %s4
  %s7 = scalar_select 0, %s6, %s4
  $region1: #{lstm_run_sequence.3} parent=0
    #allocation2 [shape = 'u8[131072]{0}', space=vmem, size = 0x20000, scoped, tag = 'input window, operand 1, single buffered']
    #allocation3 [shape = 's32[1]{0}', space=sflag, size = 0x4, scoped, tag = 'scoped memory for lstm_run_sequence.3']
    #allocation4 [shape = 'u8[2048]{0}', space=vmem, size = 0x800, scoped, tag = 'input window, operand 2, single buffered']
    #allocation5 [shape = 's32[1]{0}', space=sflag, size = 0x4, scoped, tag = 'scoped memory for lstm_run_sequence.3']
    %8 = vsyncpa [#allocation3], 0
    %9 = vsyncpa [#allocation5], 0
    // Predicated region
    $region2: #{lstm_run_sequence.3} parent=1 // pred_check
      _
    $region3: #{lstm_run_sequence.3} parent=1 // pred_check_branch
      %11 = sbr.rel (0) target = $region5
    $region4: #{lstm_run_sequence.3} parent=1 // pred_region
      _
    $region5: #{lstm_run_sequence.3} parent=1 // pred_fallthru
      _
    // Predicated region
    $region6: #{lstm_run_sequence.3} parent=1 // pred_check
      _
    $region7: #{lstm_run_sequence.3} parent=1 // pred_check_branch
      %13 = sbr.rel (0) target = $region9
    $region8: #{lstm_run_sequence.3} parent=1 // pred_region
      %s15 = ssub.s32 4096, 4096
      %16 = vsyncadd [#allocation3], %s15
      %s17 = sshll.u32 [#allocation2], 4
      %s18 = int_to_ptr.vmem [resolvable:$true] %s17
      %23 = dma.hbm_to_vmem [thread:$0]  %s1, 4096, %s18, [#allocation3], 256, 256, 16
    $region9: #{lstm_run_sequence.3} parent=1 // pred_fallthru
      _
    // Predicated region
    $region10: #{lstm_run_sequence.3} parent=1 // pred_check
      _
    $region11: #{lstm_run_sequence.3} parent=1 // pred_check_branch
      %25 = sbr.rel (0) target = $region13
    $region12: #{lstm_run_sequence.3} parent=1 // pred_region
      %s27 = ssub.s32 64, 64
      %28 = vsyncadd [#allocation5], %s27
      %s30 = sshll.u32 [#allocation4], 4
      %s31 = int_to_ptr.vmem [resolvable:$true] %s30
      %33 = dma.hbm_to_vmem [thread:$0]  %s2, 64, %s31, [#allocation5]
    $region13: #{lstm_run_sequence.3} parent=1 // pred_fallthru
      _
    // Predicated region
    $region14: #{lstm_run_sequence.3} parent=1 // pred_check
      _
    $region15: #{lstm_run_sequence.3} parent=1 // pred_check_branch
      %35 = sbr.rel (0) target = $region17
    $region16: #{lstm_run_sequence.3} parent=1 // pred_region
      %36 = dma.done [#allocation3], 4096
    $region17: #{lstm_run_sequence.3} parent=1 // pred_fallthru
      _
    // Predicated region
    $region18: #{lstm_run_sequence.3} parent=1 // pred_check
      _
    $region19: #{lstm_run_sequence.3} parent=1 // pred_check_branch
      %38 = sbr.rel (0) target = $region21
    $region20: #{lstm_run_sequence.3} parent=1 // pred_region
      %39 = dma.done [#allocation5], 64
    $region21: #{lstm_run_sequence.3} parent=1 // pred_fallthru
      _
    %v41 = vld [vmem:[%s0] sm:$0x1]
    %v42 = vpack.c.bf16 %v41, %v41
    %v43 = vld [vmem:[#allocation2] sm:$0xff]
    %v44 = vld [vmem:[#allocation2 + $0x8] sm:$0xff]
    %v45 = vld [vmem:[#allocation2 + $0x10] sm:$0xff]
    %v46 = vld [vmem:[#allocation2 + $0x18] sm:$0xff]
    %v47 = vld [vmem:[#allocation2 + $0x20] sm:$0xff]
    %v48 = vld [vmem:[#allocation2 + $0x28] sm:$0xff]
    %v49 = vld [vmem:[#allocation2 + $0x30] sm:$0xff]
    %v50 = vld [vmem:[#allocation2 + $0x38] sm:$0xff]
    %v51 = vld [vmem:[#allocation2 + $0x40] sm:$0xff]
    %v52 = vld [vmem:[#allocation2 + $0x48] sm:$0xff]
    %v53 = vld [vmem:[#allocation2 + $0x50] sm:$0xff]
    %v54 = vld [vmem:[#allocation2 + $0x58] sm:$0xff]
    %v55 = vld [vmem:[#allocation2 + $0x60] sm:$0xff]
    %v56 = vld [vmem:[#allocation2 + $0x68] sm:$0xff]
    %v57 = vld [vmem:[#allocation2 + $0x70] sm:$0xff]
    %v58 = vld [vmem:[#allocation2 + $0x78] sm:$0xff]
    %v59 = vld [vmem:[#allocation2 + $0x80] sm:$0xff]
    %v60 = vld [vmem:[#allocation2 + $0x88] sm:$0xff]
    %v61 = vld [vmem:[#allocation2 + $0x90] sm:$0xff]
    %v62 = vld [vmem:[#allocation2 + $0x98] sm:$0xff]
    %v63 = vld [vmem:[#allocation2 + $0xa0] sm:$0xff]
    %v64 = vld [vmem:[#allocation2 + $0xa8] sm:$0xff]
    %v65 = vld [vmem:[#allocation2 + $0xb0] sm:$0xff]
    %v66 = vld [vmem:[#allocation2 + $0xb8] sm:$0xff]
    %v67 = vld [vmem:[#allocation2 + $0xc0] sm:$0xff]
    %v68 = vld [vmem:[#allocation2 + $0xc8] sm:$0xff]
    %v69 = vld [vmem:[#allocation2 + $0xd0] sm:$0xff]
    %v70 = vld [vmem:[#allocation2 + $0xd8] sm:$0xff]
    %v71 = vld [vmem:[#allocation2 + $0xe0] sm:$0xff]
    %v72 = vld [vmem:[#allocation2 + $0xe8] sm:$0xff]
    %v73 = vld [vmem:[#allocation2 + $0xf0] sm:$0xff]
    %v74 = vld [vmem:[#allocation2 + $0xf8] sm:$0xff]
    %v75 = vld [vmem:[#allocation4] sm:$0xf]
    %v108 = vunpack.c.l.b16 %v43
    %v109 = vunpack.c.h.b16 %v43
    %v110 = vunpack.c.l.b16 %v44
    %v111 = vunpack.c.h.b16 %v44
    %v112 = vunpack.c.l.b16 %v45
    %v113 = vunpack.c.h.b16 %v45
    %v114 = vunpack.c.l.b16 %v46
    %v115 = vunpack.c.h.b16 %v46
    %v116 = vunpack.c.l.b16 %v47
    %v117 = vunpack.c.h.b16 %v47
    %v118 = vunpack.c.l.b16 %v48
    %v119 = vunpack.c.h.b16 %v48
    %v120 = vunpack.c.l.b16 %v49
    %v121 = vunpack.c.h.b16 %v49
    %v122 = vunpack.c.l.b16 %v50
    %v123 = vunpack.c.h.b16 %v50
    %v124 = vunpack.c.l.b16 %v51
    %v125 = vunpack.c.h.b16 %v51
    %v126 = vunpack.c.l.b16 %v52
    %v127 = vunpack.c.h.b16 %v52
    %v128 = vunpack.c.l.b16 %v53
    %v129 = vunpack.c.h.b16 %v53
    %v130 = vunpack.c.l.b16 %v54
    %v131 = vunpack.c.h.b16 %v54
    %v132 = vunpack.c.l.b16 %v55
    %v133 = vunpack.c.h.b16 %v55
    %v134 = vunpack.c.l.b16 %v56
    %v135 = vunpack.c.h.b16 %v56
    %v136 = vunpack.c.l.b16 %v57
    %v137 = vunpack.c.h.b16 %v57
    %v138 = vunpack.c.l.b16 %v58
    %v139 = vunpack.c.h.b16 %v58
    %v140 = vunpack.c.l.b16 %v59
    %v141 = vunpack.c.h.b16 %v59
    %v142 = vunpack.c.l.b16 %v60
    %v143 = vunpack.c.h.b16 %v60
    %v144 = vunpack.c.l.b16 %v61
    %v145 = vunpack.c.h.b16 %v61
    %v146 = vunpack.c.l.b16 %v62
    %v147 = vunpack.c.h.b16 %v62
    %v148 = vunpack.c.l.b16 %v63
    %v149 = vunpack.c.h.b16 %v63
    %v150 = vunpack.c.l.b16 %v64
    %v151 = vunpack.c.h.b16 %v64
    %v152 = vunpack.c.l.b16 %v65
    %v153 = vunpack.c.h.b16 %v65
    %v154 = vunpack.c.l.b16 %v66
    %v155 = vunpack.c.h.b16 %v66
    %v156 = vunpack.c.l.b16 %v67
    %v157 = vunpack.c.h.b16 %v67
    %v158 = vunpack.c.l.b16 %v68
    %v159 = vunpack.c.h.b16 %v68
    %v160 = vunpack.c.l.b16 %v69
    %v161 = vunpack.c.h.b16 %v69
    %v162 = vunpack.c.l.b16 %v70
    %v163 = vunpack.c.h.b16 %v70
    %v164 = vunpack.c.l.b16 %v71
    %v165 = vunpack.c.h.b16 %v71
    %v166 = vunpack.c.l.b16 %v72
    %v167 = vunpack.c.h.b16 %v72
    %v168 = vunpack.c.l.b16 %v73
    %v169 = vunpack.c.h.b16 %v73
    %v170 = vunpack.c.l.b16 %v74
    %v171 = vunpack.c.h.b16 %v74
    %v172 = vpack.c.b16 %v112, %v108
    %v173 = vpack.c.b16 %v113, %v109
    %v174 = vpack.c.b16 %v114, %v110
    %v175 = vpack.c.b16 %v115, %v111
    %v176 = vpack.c.b16 %v120, %v116
    %v177 = vpack.c.b16 %v121, %v117
    %v178 = vpack.c.b16 %v122, %v118
    %v179 = vpack.c.b16 %v123, %v119
    %v180 = vpack.c.b16 %v128, %v124
    %v181 = vpack.c.b16 %v129, %v125
    %v182 = vpack.c.b16 %v130, %v126
    %v183 = vpack.c.b16 %v131, %v127
    %v184 = vpack.c.b16 %v136, %v132
    %v185 = vpack.c.b16 %v137, %v133
    %v186 = vpack.c.b16 %v138, %v134
    %v187 = vpack.c.b16 %v139, %v135
    %v188 = vpack.c.b16 %v144, %v140
    %v189 = vpack.c.b16 %v145, %v141
    %v190 = vpack.c.b16 %v146, %v142
    %v191 = vpack.c.b16 %v147, %v143
    %v192 = vpack.c.b16 %v152, %v148
    %v193 = vpack.c.b16 %v153, %v149
    %v194 = vpack.c.b16 %v154, %v150
    %v195 = vpack.c.b16 %v155, %v151
    %v196 = vpack.c.b16 %v160, %v156
    %v197 = vpack.c.b16 %v161, %v157
    %v198 = vpack.c.b16 %v162, %v158
    %v199 = vpack.c.b16 %v163, %v159
    %v200 = vpack.c.b16 %v168, %v164
    %v201 = vpack.c.b16 %v169, %v165
    %v202 = vpack.c.b16 %v170, %v166
    %v203 = vpack.c.b16 %v171, %v167
    %v237 = vlaneseq
    %v238 = vshrl.u32 %v237, 7
    %v239 = vsub.s32 0, %v238
    %v240 = vrot.slane %v75, %v239
    %v241 = vlaneseq
    %v242 = vshrl.u32 %v241, 7
    %v243 = vsub.s32 1, %v242
    %v244 = vrot.slane %v75, %v243
    %v245 = vlaneseq
    %v246 = vshrl.u32 %v245, 7
    %v247 = vsub.s32 2, %v246
    %v248 = vrot.slane %v75, %v247
    %v249 = vlaneseq
    %v250 = vshrl.u32 %v249, 7
    %v251 = vsub.s32 3, %v250
    %v252 = vrot.slane %v75, %v251
    %257 = vmatprep.subr.bf16.mxu0 %v201
    %258 = vmatpush1.bf16.msra.mxu0 %v200
    %259 = vmatprep.subr.bf16.mxu0 %v197
    %260 = vmatpush1.bf16.msra.mxu0 %v196
    %261 = vmatprep.subr.bf16.mxu0 %v193
    %262 = vmatpush1.bf16.msra.mxu0 %v192
    %263 = vmatprep.subr.bf16.mxu0 %v189
    %264 = vmatpush1.bf16.msra.mxu0 %v188
    %265 = vmatprep.subr.bf16.mxu0 %v185
    %266 = vmatpush1.bf16.msra.mxu0 %v184
    %267 = vmatprep.subr.bf16.mxu0 %v181
    %268 = vmatpush1.bf16.msra.mxu0 %v180
    %269 = vmatprep.subr.bf16.mxu0 %v177
    %270 = vmatpush1.bf16.msra.mxu0 %v176
    %271 = vmatprep.subr.bf16.mxu0 %v173
    %272 = vmatpush1.bf16.msra.mxu0 %v172
    %273 = vmatprep.subr.bf16.mxu0 0
    %274 = vmatpush2.bf16.msra.mxu0 0
    %275 = vmatprep.subr.bf16.mxu0 0
    %276 = vmatpush2.bf16.msra.mxu0 0
    %277 = vmatprep.subr.bf16.mxu0 0
    %278 = vmatpush2.bf16.msra.mxu0 0
    %279 = vmatprep.subr.bf16.mxu0 0
    %280 = vmatpush2.bf16.msra.mxu0 0
    %281 = vmatprep.subr.bf16.mxu0 0
    %282 = vmatpush2.bf16.msra.mxu0 0
    %283 = vmatprep.subr.bf16.mxu0 0
    %284 = vmatpush2.bf16.msra.mxu0 0
    %285 = vmatprep.subr.bf16.mxu0 0
    %286 = vmatpush2.bf16.msra.mxu0 0
    %287 = vmatprep.subr.bf16.mxu0 0
    %288 = vmatpush2.bf16.msra.mxu0 0
    %289 = vmatprep.mubr.bf16.mxu0 0
    %290 = vmatmul.mubr.bf16.gmra.mxu0 %v42
    %v291 = vpop.f32.mrf.mxu0
    %v292 = vadd.f32 %v240, %v291
    %v293 = vpop.f32.mrf.mxu0
    %v294 = vadd.f32 %v244, %v293
    %v295 = vpop.f32.mrf.mxu0
    %v296 = vpop.f32.mrf.mxu0
    %297 = vdwg.mxu0
    %298 = vmatprep.subr.bf16.mxu0 %v203
    %299 = vmatpush1.bf16.msra.mxu0 %v202
    %300 = vmatprep.subr.bf16.mxu0 %v199
    %301 = vmatpush1.bf16.msra.mxu0 %v198
    %302 = vmatprep.subr.bf16.mxu0 %v195
    %303 = vmatpush1.bf16.msra.mxu0 %v194
    %304 = vmatprep.subr.bf16.mxu0 %v191
    %305 = vmatpush1.bf16.msra.mxu0 %v190
    %306 = vmatprep.subr.bf16.mxu0 %v187
    %307 = vmatpush1.bf16.msra.mxu0 %v186
    %308 = vmatprep.subr.bf16.mxu0 %v183
    %309 = vmatpush1.bf16.msra.mxu0 %v182
    %310 = vmatprep.subr.bf16.mxu0 %v179
    %311 = vmatpush1.bf16.msra.mxu0 %v178
    %312 = vmatprep.subr.bf16.mxu0 %v175
    %313 = vmatpush1.bf16.msra.mxu0 %v174
    %314 = vmatprep.subr.bf16.mxu0 0
    %315 = vmatpush2.bf16.msra.mxu0 0
    %316 = vmatprep.subr.bf16.mxu0 0
    %317 = vmatpush2.bf16.msra.mxu0 0
    %318 = vmatprep.subr.bf16.mxu0 0
    %319 = vmatpush2.bf16.msra.mxu0 0
    %320 = vmatprep.subr.bf16.mxu0 0
    %321 = vmatpush2.bf16.msra.mxu0 0
    %322 = vmatprep.subr.bf16.mxu0 0
    %323 = vmatpush2.bf16.msra.mxu0 0
    %324 = vmatprep.subr.bf16.mxu0 0
    %325 = vmatpush2.bf16.msra.mxu0 0
    %326 = vmatprep.subr.bf16.mxu0 0
    %327 = vmatpush2.bf16.msra.mxu0 0
    %328 = vmatprep.subr.bf16.mxu0 0
    %329 = vmatpush2.bf16.msra.mxu0 0
    %330 = vmatprep.mubr.bf16.mxu0 0
    %331 = vmatmul.mubr.bf16.gmra.mxu0 %v42
    %v332 = vpop.f32.mrf.mxu0
    %v333 = vadd.f32 %v248, %v332
    %v334 = vpop.f32.mrf.mxu0
    %v335 = vadd.f32 %v252, %v334
    %v336 = vpop.f32.mrf.mxu0
    %v337 = vpop.f32.mrf.mxu0
    %338 = vdwg.mxu0
    %v343 = vcombine.low %v292, %v294
    %v344 = vcombine.low %v333, %v335
    %v346 = vunpack.c.l.s4 1966171168
    %v347 = vunpack.c.0.s8 %v346
    %v348 = vlaneseq
    %v349 = vshrl.u32 %v348, 7
    %v350 = vsub.s32 %v347, %v349
    %v351 = vrot.slane %v343, %v350
    %v353 = vunpack.c.l.s4 1966171168
    %v354 = vunpack.c.0.s8 %v353
    %v355 = vlaneseq
    %v356 = vshrl.u32 %v355, 7
    %v357 = vsub.s32 %v354, %v356
    %v358 = vrot.slane %v344, %v357
    %v359 = vcombine.low %v351, %v358
    %v361 = vunpack.c.l.s4 1966171168
    %v362 = vunpack.c.0.s8 %v361
    %v363 = vlaneseq
    %v364 = vshrl.u32 %v363, 7
    %v365 = vsub.s32 %v362, %v364
    %v366 = vrot.slane %v359, %v365
    %v368 = vlaneseq
    %vm369 = vcmp.ge.s32.totalorder %v368, 0
    %vm370 = vcmp.lt.s32.totalorder %v368, 512
    %vm371 = vmand %vm369, %vm370
    %372 = vst.msk [vmem:[%s3] sm:$0xf] %vm371, %v366
    // Predicated region
    $region22: #{lstm_run_sequence.3} parent=1 // pred_check
      _
    $region23: #{lstm_run_sequence.3} parent=1 // pred_check_branch
      %374 = sbr.rel (0) target = $region25
    $region24: #{lstm_run_sequence.3} parent=1 // pred_region
      _
    $region25: #{lstm_run_sequence.3} parent=1 // pred_fallthru
      _
    // Predicated region
    $region26: #{lstm_run_sequence.3} parent=1 // pred_check
      _
    $region27: #{lstm_run_sequence.3} parent=1 // pred_check_branch
      %376 = sbr.rel (0) target = $region29
    $region28: #{lstm_run_sequence.3} parent=1 // pred_region
      _
    $region29: #{lstm_run_sequence.3} parent=1 // pred_fallthru
      _
    %377 = vsyncpa [#allocation3], 1
    %378 = vsyncpa [#allocation5], 1

// kernel: lstm_run_sequence.5
$region0: #{lstm_run_sequence.5}
  #allocation0 [shape = 'u32[]', space=smem, size = 0x4, offset = 0x4, fixed_abs, tag = 'smem constant byte address 0x4 - core index']
  #allocation1 [shape = 'u32[144,128]{1,0:T(1,128)}', space=vmem, size = 0x12000, scoped, tag = 'internal scratch']
  %s0 = inlined_call_operand.vmem [shape: f32[1,128], index: 0, kind: input, shape index: {}]
  %s1 = inlined_call_operand.vmem [shape: bf16[128,128], index: 1, kind: input, shape index: {}]
  %s2 = inlined_call_operand.vmem [shape: f32[1,128], index: 2, kind: input, shape index: {}]
  %s3 = inlined_call_operand.hbm [shape: f32[1,128], index: 3, kind: output, shape index: {}]
  %s4 = sld [smem:[#allocation0]]
  $region22: #{lstm_run_sequence.5} parent=0
    _
  %s6 = ssub.s32 1, %s4
  %s7 = scalar_select 0, %s6, %s4
  $region1: #{lstm_run_sequence.5} parent=0
    #allocation2 [shape = 'u8[512]{0}', space=vmem, size = 0x400, scoped, tag = 'output window, operand 0, single buffered']
    #allocation3 [shape = 's32[1]{0}', space=sflag, size = 0x4, scoped, tag = 'scoped memory for lstm_run_sequence.5']
    %8 = vsyncpa [#allocation3], 0
    // Predicated region
    $region2: #{lstm_run_sequence.5} parent=1 // pred_check
      _
    $region3: #{lstm_run_sequence.5} parent=1 // pred_check_branch
      %10 = sbr.rel (0) target = $region5
    $region4: #{lstm_run_sequence.5} parent=1 // pred_region
      _
    $region5: #{lstm_run_sequence.5} parent=1 // pred_fallthru
      _
    // Predicated region
    $region6: #{lstm_run_sequence.5} parent=1 // pred_check
      _
    $region7: #{lstm_run_sequence.5} parent=1 // pred_check_branch
      %12 = sbr.rel (0) target = $region9
    $region8: #{lstm_run_sequence.5} parent=1 // pred_region
      _
    $region9: #{lstm_run_sequence.5} parent=1 // pred_fallthru
      _
    // Predicated region
    $region10: #{lstm_run_sequence.5} parent=1 // pred_check
      _
    $region11: #{lstm_run_sequence.5} parent=1 // pred_check_branch
      %14 = sbr.rel (0) target = $region13
    $region12: #{lstm_run_sequence.5} parent=1 // pred_region
      _
    $region13: #{lstm_run_sequence.5} parent=1 // pred_fallthru
      _
    %v16 = vld [vmem:[%s0] sm:$0x1]
    %v17 = vpack.c.bf16 %v16, %v16
    %v18 = vld [vmem:[%s1] sm:$0xf]
    %v19 = vld [vmem:[%s1 + $0x4] sm:$0xf]
    %v20 = vld [vmem:[%s1 + $0x8] sm:$0xf]
    %v21 = vld [vmem:[%s1 + $0xc] sm:$0xf]
    %v22 = vld [vmem:[%s1 + $0x10] sm:$0xf]
    %v23 = vld [vmem:[%s1 + $0x14] sm:$0xf]
    %v24 = vld [vmem:[%s1 + $0x18] sm:$0xf]
    %v25 = vld [vmem:[%s1 + $0x1c] sm:$0xf]
    %v26 = vld [vmem:[%s1 + $0x20] sm:$0xf]
    %v27 = vld [vmem:[%s1 + $0x24] sm:$0xf]
    %v28 = vld [vmem:[%s1 + $0x28] sm:$0xf]
    %v29 = vld [vmem:[%s1 + $0x2c] sm:$0xf]
    %v30 = vld [vmem:[%s1 + $0x30] sm:$0xf]
    %v31 = vld [vmem:[%s1 + $0x34] sm:$0xf]
    %v32 = vld [vmem:[%s1 + $0x38] sm:$0xf]
    %v33 = vld [vmem:[%s1 + $0x3c] sm:$0xf]
    %v34 = vld [vmem:[%s2] sm:$0x1]
    %v51 = vunpack.c.l.b16 %v18
    %v52 = vunpack.c.l.b16 %v19
    %v53 = vunpack.c.l.b16 %v20
    %v54 = vunpack.c.l.b16 %v21
    %v55 = vunpack.c.l.b16 %v22
    %v56 = vunpack.c.l.b16 %v23
    %v57 = vunpack.c.l.b16 %v24
    %v58 = vunpack.c.l.b16 %v25
    %v59 = vunpack.c.l.b16 %v26
    %v60 = vunpack.c.l.b16 %v27
    %v61 = vunpack.c.l.b16 %v28
    %v62 = vunpack.c.l.b16 %v29
    %v63 = vunpack.c.l.b16 %v30
    %v64 = vunpack.c.l.b16 %v31
    %v65 = vunpack.c.l.b16 %v32
    %v66 = vunpack.c.l.b16 %v33
    %v67 = vpack.c.b16 %v52, %v51
    %v68 = vpack.c.b16 %v54, %v53
    %v69 = vpack.c.b16 %v56, %v55
    %v70 = vpack.c.b16 %v58, %v57
    %v71 = vpack.c.b16 %v60, %v59
    %v72 = vpack.c.b16 %v62, %v61
    %v73 = vpack.c.b16 %v64, %v63
    %v74 = vpack.c.b16 %v66, %v65
    %83 = vmatprep.subr.bf16.mxu0 0
    %84 = vmatpush1.bf16.msra.mxu0 %v74
    %85 = vmatprep.subr.bf16.mxu0 0
    %86 = vmatpush1.bf16.msra.mxu0 %v73
    %87 = vmatprep.subr.bf16.mxu0 0
    %88 = vmatpush1.bf16.msra.mxu0 %v72
    %89 = vmatprep.subr.bf16.mxu0 0
    %90 = vmatpush1.bf16.msra.mxu0 %v71
    %91 = vmatprep.subr.bf16.mxu0 0
    %92 = vmatpush1.bf16.msra.mxu0 %v70
    %93 = vmatprep.subr.bf16.mxu0 0
    %94 = vmatpush1.bf16.msra.mxu0 %v69
    %95 = vmatprep.subr.bf16.mxu0 0
    %96 = vmatpush1.bf16.msra.mxu0 %v68
    %97 = vmatprep.subr.bf16.mxu0 0
    %98 = vmatpush1.bf16.msra.mxu0 %v67
    %99 = vmatprep.subr.bf16.mxu0 0
    %100 = vmatpush2.bf16.msra.mxu0 0
    %101 = vmatprep.subr.bf16.mxu0 0
    %102 = vmatpush2.bf16.msra.mxu0 0
    %103 = vmatprep.subr.bf16.mxu0 0
    %104 = vmatpush2.bf16.msra.mxu0 0
    %105 = vmatprep.subr.bf16.mxu0 0
    %106 = vmatpush2.bf16.msra.mxu0 0
    %107 = vmatprep.subr.bf16.mxu0 0
    %108 = vmatpush2.bf16.msra.mxu0 0
    %109 = vmatprep.subr.bf16.mxu0 0
    %110 = vmatpush2.bf16.msra.mxu0 0
    %111 = vmatprep.subr.bf16.mxu0 0
    %112 = vmatpush2.bf16.msra.mxu0 0
    %113 = vmatprep.subr.bf16.mxu0 0
    %114 = vmatpush2.bf16.msra.mxu0 0
    %115 = vmatprep.mubr.bf16.mxu0 0
    %116 = vmatmul.mubr.bf16.gmra.mxu0 %v17
    %v117 = vpop.f32.mrf.mxu0
    %v118 = vadd.f32 %v34, %v117
    %v119 = vpop.f32.mrf.mxu0
    %v120 = vpop.f32.mrf.mxu0
    %v121 = vpop.f32.mrf.mxu0
    %122 = vdwg.mxu0
    %vm123 = vcmask 1040384
    %v124 = vsel %vm123, %v118, -inf
    %125 = vmax.xlane.f32.xlu0 %v124
    %v126 = vpop.xlane.xlu0 %125
    %v127 = vsub.f32 %v118, %v126
    %v128 = vmul.f32 %v127, 1.442695
    %v129 = vpow.pop %v128
    %v130 = vsel %vm123, %v129, 0.0
    %131 = vadd.xlane.f32.xlu0 %v130
    %v132 = vpop.xlane.xlu0 %131
    %v133 = vlog2.pop %v132
    %v134 = vmul.f32 %v133, 0.6931472
    %v135 = vadd.f32 %v134, %v126
    %v136 = vsub.f32 %v118, %v135
    %137 = vst [vmem:[#allocation2] sm:$0x1] %v136
    // Predicated region
    $region14: #{lstm_run_sequence.5} parent=1 // pred_check
      _
    $region15: #{lstm_run_sequence.5} parent=1 // pred_check_branch
      %139 = sbr.rel (0) target = $region17
    $region16: #{lstm_run_sequence.5} parent=1 // pred_region
      %s141 = ssub.s32 16, 16
      %142 = vsyncadd [#allocation3], %s141
      %s144 = sshll.u32 [#allocation2], 4
      %s145 = int_to_ptr.vmem [resolvable:$true] %s144
      %147 = dma.vmem_to_hbm [thread:$0]  %s145, 16, %s3, [#allocation3]
    $region17: #{lstm_run_sequence.5} parent=1 // pred_fallthru
      _
    // Predicated region
    $region18: #{lstm_run_sequence.5} parent=1 // pred_check
      _
    $region19: #{lstm_run_sequence.5} parent=1 // pred_check_branch
      %149 = sbr.rel (0) target = $region21
    $region20: #{lstm_run_sequence.5} parent=1 // pred_region
      %150 = dma.done [#allocation3], 16
    $region21: #{lstm_run_sequence.5} parent=1 // pred_fallthru
      _
    %151 = vsyncpa [#allocation3], 1

// kernel: lstm_run_sequence.4
$region0: #{lstm_run_sequence.4}
  #allocation0 [shape = 'u32[]', space=smem, size = 0x4, offset = 0x4, fixed_abs, tag = 'smem constant byte address 0x4 - core index']
  #allocation1 [shape = 'u32[144,128]{1,0:T(1,128)}', space=vmem, size = 0x12000, scoped, tag = 'internal scratch']
  %s0 = inlined_call_operand.vmem [shape: f32[1,1,512], index: 0, kind: input, shape index: {}]
  %s1 = inlined_call_operand.vmem [shape: f32[1,128], index: 1, kind: input, shape index: {}]
  %s2 = inlined_call_operand.vmem [shape: f32[1,128], index: 2, kind: input, shape index: {}]
  %s3 = inlined_call_operand.vmem [shape: bf16[128,512], index: 3, kind: input, shape index: {}]
  %s4 = inlined_call_operand.vmem [shape: f32[2,512], index: 4, kind: input, shape index: {}]
  %s5 = inlined_call_operand.vmem [shape: f32[1,1,128], index: 5, kind: output, shape index: {0}]
  %s6 = inlined_call_operand.hbm [shape: f32[1,128], index: 6, kind: output, shape index: {1}]
  %s7 = inlined_call_operand.hbm [shape: f32[1,128], index: 7, kind: output, shape index: {2}]
  %8 = xla_tuple %s5, %s6, %s7
  %s9 = sld [smem:[#allocation0]]
  $region50: #{lstm_run_sequence.4} parent=0
    _
  %s11 = ssub.s32 1, %s9
  %s12 = scalar_select 0, %s11, %s9
  $region1: #{lstm_run_sequence.4} parent=0
    #allocation2 [shape = 'u8[512]{0}', space=vmem, size = 0x400, scoped, tag = 'output window, operand 1, single buffered']
    #allocation3 [shape = 's32[1]{0}', space=sflag, size = 0x4, scoped, tag = 'scoped memory for lstm_run_sequence.4']
    #allocation4 [shape = 'u8[512]{0}', space=vmem, size = 0x400, scoped, tag = 'output window, operand 2, single buffered']
    #allocation5 [shape = 's32[1]{0}', space=sflag, size = 0x4, scoped, tag = 'scoped memory for lstm_run_sequence.4']
    %13 = vsyncpa [#allocation3], 0
    %14 = vsyncpa [#allocation5], 0
    // Predicated region
    $region2: #{lstm_run_sequence.4} parent=1 // pred_check
      _
    $region3: #{lstm_run_sequence.4} parent=1 // pred_check_branch
      %16 = sbr.rel (0) target = $region5
    $region4: #{lstm_run_sequence.4} parent=1 // pred_region
      _
    $region5: #{lstm_run_sequence.4} parent=1 // pred_fallthru
      _
    // Predicated region
    $region6: #{lstm_run_sequence.4} parent=1 // pred_check
      _
    $region7: #{lstm_run_sequence.4} parent=1 // pred_check_branch
      %18 = sbr.rel (0) target = $region9
    $region8: #{lstm_run_sequence.4} parent=1 // pred_region
      _
    $region9: #{lstm_run_sequence.4} parent=1 // pred_fallthru
      _
    // Predicated region
    $region10: #{lstm_run_sequence.4} parent=1 // pred_check
      _
    $region11: #{lstm_run_sequence.4} parent=1 // pred_check_branch
      %20 = sbr.rel (0) target = $region13
    $region12: #{lstm_run_sequence.4} parent=1 // pred_region
      _
    $region13: #{lstm_run_sequence.4} parent=1 // pred_fallthru
      _
    // Predicated region
    $region14: #{lstm_run_sequence.4} parent=1 // pred_check
      _
    $region15: #{lstm_run_sequence.4} parent=1 // pred_check_branch
      %22 = sbr.rel (0) target = $region17
    $region16: #{lstm_run_sequence.4} parent=1 // pred_region
      _
    $region17: #{lstm_run_sequence.4} parent=1 // pred_fallthru
      _
    // Predicated region
    $region18: #{lstm_run_sequence.4} parent=1 // pred_check
      _
    $region19: #{lstm_run_sequence.4} parent=1 // pred_check_branch
      %24 = sbr.rel (0) target = $region21
    $region20: #{lstm_run_sequence.4} parent=1 // pred_region
      _
    $region21: #{lstm_run_sequence.4} parent=1 // pred_fallthru
      _
    %p26 = scmp.eq.s32.totalorder 0, 0
    // Predicated region
    $region22: #{lstm_run_sequence.4} parent=1 // pred_check
      %p27 = pneg %p26
    $region23: #{lstm_run_sequence.4} parent=1 // pred_check_branch
      %29 = sbr.rel (%p27) target = $region25
    $region24: #{lstm_run_sequence.4} parent=1 // pred_region
      %v30 = vld [vmem:[%s1] sm:$0x1]
      %31 = vst [vmem:[#allocation2] sm:$0x1] %v30
      %v32 = vld [vmem:[%s2] sm:$0x1]
      %33 = vst [vmem:[#allocation4] sm:$0x1] %v32
    $region25: #{lstm_run_sequence.4} parent=1 // pred_fallthru
      _
    %v34 = vld [vmem:[%s3] sm:$0xff]
    %v35 = vld [vmem:[%s3 + $0x8] sm:$0xff]
    %v36 = vld [vmem:[%s3 + $0x10] sm:$0xff]
    %v37 = vld [vmem:[%s3 + $0x18] sm:$0xff]
    %v38 = vld [vmem:[%s3 + $0x20] sm:$0xff]
    %v39 = vld [vmem:[%s3 + $0x28] sm:$0xff]
    %v40 = vld [vmem:[%s3 + $0x30] sm:$0xff]
    %v41 = vld [vmem:[%s3 + $0x38] sm:$0xff]
    %v42 = vld [vmem:[%s3 + $0x40] sm:$0xff]
    %v43 = vld [vmem:[%s3 + $0x48] sm:$0xff]
    %v44 = vld [vmem:[%s3 + $0x50] sm:$0xff]
    %v45 = vld [vmem:[%s3 + $0x58] sm:$0xff]
    %v46 = vld [vmem:[%s3 + $0x60] sm:$0xff]
    %v47 = vld [vmem:[%s3 + $0x68] sm:$0xff]
    %v48 = vld [vmem:[%s3 + $0x70] sm:$0xff]
    %v49 = vld [vmem:[%s3 + $0x78] sm:$0xff]
    %v50 = vld [vmem:[%s3 + $0x80] sm:$0xff]
    %v51 = vld [vmem:[%s3 + $0x88] sm:$0xff]
    %v52 = vld [vmem:[%s3 + $0x90] sm:$0xff]
    %v53 = vld [vmem:[%s3 + $0x98] sm:$0xff]
    %v54 = vld [vmem:[%s3 + $0xa0] sm:$0xff]
    %v55 = vld [vmem:[%s3 + $0xa8] sm:$0xff]
    %v56 = vld [vmem:[%s3 + $0xb0] sm:$0xff]
    %v57 = vld [vmem:[%s3 + $0xb8] sm:$0xff]
    %v58 = vld [vmem:[%s3 + $0xc0] sm:$0xff]
    %v59 = vld [vmem:[%s3 + $0xc8] sm:$0xff]
    %v60 = vld [vmem:[%s3 + $0xd0] sm:$0xff]
    %v61 = vld [vmem:[%s3 + $0xd8] sm:$0xff]
    %v62 = vld [vmem:[%s3 + $0xe0] sm:$0xff]
    %v63 = vld [vmem:[%s3 + $0xe8] sm:$0xff]
    %v64 = vld [vmem:[%s3 + $0xf0] sm:$0xff]
    %v65 = vld [vmem:[%s3 + $0xf8] sm:$0xff]
    %v66 = vld [vmem:[%s4] ss:$2 sm:$0xf]
    %s67 = scalar_lea.vmem %s4, 1
    %v68 = vld [vmem:[%s67] ss:$2 sm:$0xf]
    %v69 = vld [vmem:[#allocation2] sm:$0x1]
    %v70 = vld [vmem:[#allocation4] sm:$0x1]
    %v71 = vld [vmem:[%s0] sm:$0xf]
    %v72 = vpack.c.bf16 %v69, %v69
    %v105 = vunpack.c.l.b16 %v34
    %v106 = vunpack.c.h.b16 %v34
    %v107 = vunpack.c.l.b16 %v35
    %v108 = vunpack.c.h.b16 %v35
    %v109 = vunpack.c.l.b16 %v36
    %v110 = vunpack.c.h.b16 %v36
    %v111 = vunpack.c.l.b16 %v37
    %v112 = vunpack.c.h.b16 %v37
    %v113 = vunpack.c.l.b16 %v38
    %v114 = vunpack.c.h.b16 %v38
    %v115 = vunpack.c.l.b16 %v39
    %v116 = vunpack.c.h.b16 %v39
    %v117 = vunpack.c.l.b16 %v40
    %v118 = vunpack.c.h.b16 %v40
    %v119 = vunpack.c.l.b16 %v41
    %v120 = vunpack.c.h.b16 %v41
    %v121 = vunpack.c.l.b16 %v42
    %v122 = vunpack.c.h.b16 %v42
    %v123 = vunpack.c.l.b16 %v43
    %v124 = vunpack.c.h.b16 %v43
    %v125 = vunpack.c.l.b16 %v44
    %v126 = vunpack.c.h.b16 %v44
    %v127 = vunpack.c.l.b16 %v45
    %v128 = vunpack.c.h.b16 %v45
    %v129 = vunpack.c.l.b16 %v46
    %v130 = vunpack.c.h.b16 %v46
    %v131 = vunpack.c.l.b16 %v47
    %v132 = vunpack.c.h.b16 %v47
    %v133 = vunpack.c.l.b16 %v48
    %v134 = vunpack.c.h.b16 %v48
    %v135 = vunpack.c.l.b16 %v49
    %v136 = vunpack.c.h.b16 %v49
    %v137 = vunpack.c.l.b16 %v50
    %v138 = vunpack.c.h.b16 %v50
    %v139 = vunpack.c.l.b16 %v51
    %v140 = vunpack.c.h.b16 %v51
    %v141 = vunpack.c.l.b16 %v52
    %v142 = vunpack.c.h.b16 %v52
    %v143 = vunpack.c.l.b16 %v53
    %v144 = vunpack.c.h.b16 %v53
    %v145 = vunpack.c.l.b16 %v54
    %v146 = vunpack.c.h.b16 %v54
    %v147 = vunpack.c.l.b16 %v55
    %v148 = vunpack.c.h.b16 %v55
    %v149 = vunpack.c.l.b16 %v56
    %v150 = vunpack.c.h.b16 %v56
    %v151 = vunpack.c.l.b16 %v57
    %v152 = vunpack.c.h.b16 %v57
    %v153 = vunpack.c.l.b16 %v58
    %v154 = vunpack.c.h.b16 %v58
    %v155 = vunpack.c.l.b16 %v59
    %v156 = vunpack.c.h.b16 %v59
    %v157 = vunpack.c.l.b16 %v60
    %v158 = vunpack.c.h.b16 %v60
    %v159 = vunpack.c.l.b16 %v61
    %v160 = vunpack.c.h.b16 %v61
    %v161 = vunpack.c.l.b16 %v62
    %v162 = vunpack.c.h.b16 %v62
    %v163 = vunpack.c.l.b16 %v63
    %v164 = vunpack.c.h.b16 %v63
    %v165 = vunpack.c.l.b16 %v64
    %v166 = vunpack.c.h.b16 %v64
    %v167 = vunpack.c.l.b16 %v65
    %v168 = vunpack.c.h.b16 %v65
    %v169 = vpack.c.b16 %v109, %v105
    %v170 = vpack.c.b16 %v110, %v106
    %v171 = vpack.c.b16 %v111, %v107
    %v172 = vpack.c.b16 %v112, %v108
    %v173 = vpack.c.b16 %v117, %v113
    %v174 = vpack.c.b16 %v118, %v114
    %v175 = vpack.c.b16 %v119, %v115
    %v176 = vpack.c.b16 %v120, %v116
    %v177 = vpack.c.b16 %v125, %v121
    %v178 = vpack.c.b16 %v126, %v122
    %v179 = vpack.c.b16 %v127, %v123
    %v180 = vpack.c.b16 %v128, %v124
    %v181 = vpack.c.b16 %v133, %v129
    %v182 = vpack.c.b16 %v134, %v130
    %v183 = vpack.c.b16 %v135, %v131
    %v184 = vpack.c.b16 %v136, %v132
    %v185 = vpack.c.b16 %v141, %v137
    %v186 = vpack.c.b16 %v142, %v138
    %v187 = vpack.c.b16 %v143, %v139
    %v188 = vpack.c.b16 %v144, %v140
    %v189 = vpack.c.b16 %v149, %v145
    %v190 = vpack.c.b16 %v150, %v146
    %v191 = vpack.c.b16 %v151, %v147
    %v192 = vpack.c.b16 %v152, %v148
    %v193 = vpack.c.b16 %v157, %v153
    %v194 = vpack.c.b16 %v158, %v154
    %v195 = vpack.c.b16 %v159, %v155
    %v196 = vpack.c.b16 %v160, %v156
    %v197 = vpack.c.b16 %v165, %v161
    %v198 = vpack.c.b16 %v166, %v162
    %v199 = vpack.c.b16 %v167, %v163
    %v200 = vpack.c.b16 %v168, %v164
    %233 = vmatprep.subr.bf16.mxu0 %v198
    %234 = vmatpush1.bf16.msra.mxu0 %v197
    %235 = vmatprep.subr.bf16.mxu0 %v194
    %236 = vmatpush1.bf16.msra.mxu0 %v193
    %237 = vmatprep.subr.bf16.mxu0 %v190
    %238 = vmatpush1.bf16.msra.mxu0 %v189
    %239 = vmatprep.subr.bf16.mxu0 %v186
    %240 = vmatpush1.bf16.msra.mxu0 %v185
    %241 = vmatprep.subr.bf16.mxu0 %v182
    %242 = vmatpush1.bf16.msra.mxu0 %v181
    %243 = vmatprep.subr.bf16.mxu0 %v178
    %244 = vmatpush1.bf16.msra.mxu0 %v177
    %245 = vmatprep.subr.bf16.mxu0 %v174
    %246 = vmatpush1.bf16.msra.mxu0 %v173
    %247 = vmatprep.subr.bf16.mxu0 %v170
    %248 = vmatpush1.bf16.msra.mxu0 %v169
    %249 = vmatprep.subr.bf16.mxu0 0
    %250 = vmatpush2.bf16.msra.mxu0 0
    %251 = vmatprep.subr.bf16.mxu0 0
    %252 = vmatpush2.bf16.msra.mxu0 0
    %253 = vmatprep.subr.bf16.mxu0 0
    %254 = vmatpush2.bf16.msra.mxu0 0
    %255 = vmatprep.subr.bf16.mxu0 0
    %256 = vmatpush2.bf16.msra.mxu0 0
    %257 = vmatprep.subr.bf16.mxu0 0
    %258 = vmatpush2.bf16.msra.mxu0 0
    %259 = vmatprep.subr.bf16.mxu0 0
    %260 = vmatpush2.bf16.msra.mxu0 0
    %261 = vmatprep.subr.bf16.mxu0 0
    %262 = vmatpush2.bf16.msra.mxu0 0
    %263 = vmatprep.subr.bf16.mxu0 0
    %264 = vmatpush2.bf16.msra.mxu0 0
    %265 = vmatprep.mubr.bf16.mxu0 0
    %266 = vmatmul.mubr.bf16.gmra.mxu0 %v72
    %v267 = vpop.f32.mrf.mxu0
    %v268 = vadd.f32 0.0, %v267
    %v269 = vpop.f32.mrf.mxu0
    %v270 = vadd.f32 0.0, %v269
    %v271 = vpop.f32.mrf.mxu0
    %v272 = vpop.f32.mrf.mxu0
    %273 = vdwg.mxu0
    %274 = vmatprep.subr.bf16.mxu0 %v200
    %275 = vmatpush1.bf16.msra.mxu0 %v199
    %276 = vmatprep.subr.bf16.mxu0 %v196
    %277 = vmatpush1.bf16.msra.mxu0 %v195
    %278 = vmatprep.subr.bf16.mxu0 %v192
    %279 = vmatpush1.bf16.msra.mxu0 %v191
    %280 = vmatprep.subr.bf16.mxu0 %v188
    %281 = vmatpush1.bf16.msra.mxu0 %v187
    %282 = vmatprep.subr.bf16.mxu0 %v184
    %283 = vmatpush1.bf16.msra.mxu0 %v183
    %284 = vmatprep.subr.bf16.mxu0 %v180
    %285 = vmatpush1.bf16.msra.mxu0 %v179
    %286 = vmatprep.subr.bf16.mxu0 %v176
    %287 = vmatpush1.bf16.msra.mxu0 %v175
    %288 = vmatprep.subr.bf16.mxu0 %v172
    %289 = vmatpush1.bf16.msra.mxu0 %v171
    %290 = vmatprep.subr.bf16.mxu0 0
    %291 = vmatpush2.bf16.msra.mxu0 0
    %292 = vmatprep.subr.bf16.mxu0 0
    %293 = vmatpush2.bf16.msra.mxu0 0
    %294 = vmatprep.subr.bf16.mxu0 0
    %295 = vmatpush2.bf16.msra.mxu0 0
    %296 = vmatprep.subr.bf16.mxu0 0
    %297 = vmatpush2.bf16.msra.mxu0 0
    %298 = vmatprep.subr.bf16.mxu0 0
    %299 = vmatpush2.bf16.msra.mxu0 0
    %300 = vmatprep.subr.bf16.mxu0 0
    %301 = vmatpush2.bf16.msra.mxu0 0
    %302 = vmatprep.subr.bf16.mxu0 0
    %303 = vmatpush2.bf16.msra.mxu0 0
    %304 = vmatprep.subr.bf16.mxu0 0
    %305 = vmatpush2.bf16.msra.mxu0 0
    %306 = vmatprep.mubr.bf16.mxu0 0
    %307 = vmatmul.mubr.bf16.gmra.mxu0 %v72
    %v308 = vpop.f32.mrf.mxu0
    %v309 = vadd.f32 0.0, %v308
    %v310 = vpop.f32.mrf.mxu0
    %v311 = vadd.f32 0.0, %v310
    %v312 = vpop.f32.mrf.mxu0
    %v313 = vpop.f32.mrf.mxu0
    %314 = vdwg.mxu0
    %v319 = vcombine.low %v268, %v270
    %v320 = vcombine.low %v309, %v311
    %v322 = vunpack.c.l.s4 1966171168
    %v323 = vunpack.c.0.s8 %v322
    %v324 = vlaneseq
    %v325 = vshrl.u32 %v324, 7
    %v326 = vsub.s32 %v323, %v325
    %v327 = vrot.slane %v319, %v326
    %v329 = vunpack.c.l.s4 1966171168
    %v330 = vunpack.c.0.s8 %v329
    %v331 = vlaneseq
    %v332 = vshrl.u32 %v331, 7
    %v333 = vsub.s32 %v330, %v332
    %v334 = vrot.slane %v320, %v333
    %v335 = vcombine.low %v327, %v334
    %v337 = vunpack.c.l.s4 1966171168
    %v338 = vunpack.c.0.s8 %v337
    %v339 = vlaneseq
    %v340 = vshrl.u32 %v339, 7
    %v341 = vsub.s32 %v338, %v340
    %v342 = vrot.slane %v335, %v341
    %v344 = vadd.f32 %v71, %v342
    %v345 = vtanh.pop %v344
    %v346 = vmul.f32 %v345, %v66
    %v347 = vadd.f32 %v346, %v68
    %v349 = vrot.slane %v347, 1
    %v351 = vmul.f32 %v349, %v70
    %v352 = vrot.slane %v347, 2
    %v354 = vmul.f32 %v347, %v352
    %v355 = vadd.f32 %v351, %v354
    %v356 = vtanh.pop %v355
    %v357 = vrot.slane %v347, 3
    %v359 = vmul.f32 %v357, %v356
    %360 = vst [vmem:[%s5] sm:$0x1] %v359
    %361 = vst [vmem:[#allocation2] sm:$0x1] %v359
    %362 = vst [vmem:[#allocation4] sm:$0x1] %v355
    // Predicated region
    $region26: #{lstm_run_sequence.4} parent=1 // pred_check
      _
    $region27: #{lstm_run_sequence.4} parent=1 // pred_check_branch
      %364 = sbr.rel (0) target = $region29
    $region28: #{lstm_run_sequence.4} parent=1 // pred_region
      _
    $region29: #{lstm_run_sequence.4} parent=1 // pred_fallthru
      _
    // Predicated region
    $region30: #{lstm_run_sequence.4} parent=1 // pred_check
      _
    $region31: #{lstm_run_sequence.4} parent=1 // pred_check_branch
      %366 = sbr.rel (0) target = $region33
    $region32: #{lstm_run_sequence.4} parent=1 // pred_region
      %s368 = ssub.s32 16, 16
      %369 = vsyncadd [#allocation3], %s368
      %s371 = sshll.u32 [#allocation2], 4
      %s372 = int_to_ptr.vmem [resolvable:$true] %s371
      %374 = dma.vmem_to_hbm [thread:$0]  %s372, 16, %s6, [#allocation3]
    $region33: #{lstm_run_sequence.4} parent=1 // pred_fallthru
      _
    // Predicated region
    $region34: #{lstm_run_sequence.4} parent=1 // pred_check
      _
    $region35: #{lstm_run_sequence.4} parent=1 // pred_check_branch
      %376 = sbr.rel (0) target = $region37
    $region36: #{lstm_run_sequence.4} parent=1 // pred_region
      %s378 = ssub.s32 16, 16
      %379 = vsyncadd [#allocation5], %s378
      %s381 = sshll.u32 [#allocation4], 4
      %s382 = int_to_ptr.vmem [resolvable:$true] %s381
      %384 = dma.vmem_to_hbm [thread:$0]  %s382, 16, %s7, [#allocation5]
    $region37: #{lstm_run_sequence.4} parent=1 // pred_fallthru
      _
    // Predicated region
    $region38: #{lstm_run_sequence.4} parent=1 // pred_check
      _
    $region39: #{lstm_run_sequence.4} parent=1 // pred_check_branch
      %386 = sbr.rel (0) target = $region41
    $region40: #{lstm_run_sequence.4} parent=1 // pred_region
      _
    $region41: #{lstm_run_sequence.4} parent=1 // pred_fallthru
      _
    // Predicated region
    $region42: #{lstm_run_sequence.4} parent=1 // pred_check
      _
    $region43: #{lstm_run_sequence.4} parent=1 // pred_check_branch
      %388 = sbr.rel (0) target = $region45
    $region44: #{lstm_run_sequence.4} parent=1 // pred_region
      %389 = dma.done [#allocation3], 16
    $region45: #{lstm_run_sequence.4} parent=1 // pred_fallthru
      _
    // Predicated region
    $region46: #{lstm_run_sequence.4} parent=1 // pred_check
      _
    $region47: #{lstm_run_sequence.4} parent=1 // pred_check_branch
      %391 = sbr.rel (0) target = $region49
    $region48: #{lstm_run_sequence.4} parent=1 // pred_region
      %392 = dma.done [#allocation5], 16
    $region49: #{lstm_run_sequence.4} parent=1 // pred_fallthru
      _
    %393 = vsyncpa [#allocation3], 1
    %394 = vsyncpa [#allocation5], 1

</llo_original>
